<compile_context>
chip_gen: v5e
topology: v5e:2x2
jax: 0.10.0
libtpu: 0.0.40
codegen_flags: <defaults>
</compile_context>

<pallas_src>
import functools

import jax
import jax.numpy as jnp
from jax import lax
from jax.experimental import pallas as pl
from jax.experimental.pallas import tpu as pltpu


def _gate_kernel(x_ref, w_ref, o_ref, *, expert_num):
    # x_ref: (TM, K)      token tile                        (VMEM, pipelined)
    # w_ref: (K, E_pad)   full gate weight, pre-transposed  (VMEM, resident)
    # o_ref: (TM, E_pad)  lane-dense softmax output         (VMEM)
    logits = jnp.dot(
        x_ref[...], w_ref[...], preferred_element_type=jnp.float32
    )  # (TM, E_pad), f32 — standard MK@KN, no operand re-layout

    e_pad = logits.shape[-1]
    if e_pad != expert_num:
        # Mask padded expert columns so they contribute nothing to the softmax.
        col = lax.broadcasted_iota(jnp.int32, logits.shape, dimension=1)
        logits = jnp.where(col < expert_num, logits, -jnp.inf)

    # Numerically stable softmax over the expert axis (PyTorch dim=1).
    m = jnp.max(logits, axis=-1, keepdims=True)
    e = jnp.exp(logits - m)
    denom = jnp.sum(e, axis=-1, keepdims=True)
    o_ref[...] = (e * pl.reciprocal(denom, approx=False)).astype(o_ref.dtype)


def clmoe_gate_forward(x, weight, *, tm_max=1024, trim_output=True):
    """x: (N, input_size); weight: (expert_num, input_size) (nn.Linear layout)."""
    n, k = x.shape
    expert_num, k2 = weight.shape
    assert k2 == k, "weight/input feature-size mismatch"

    # Lane-dense expert axis: pad up to a multiple of 128.
    e_pad = ((expert_num + 127) // 128) * 128
    # One-time wrapper-side transpose to (K, E_pad) so the MXU sees MK@KN.
    w_kn = jnp.transpose(weight)
    if e_pad != expert_num:
        w_kn = jnp.pad(w_kn, ((0, 0), (0, e_pad - expert_num)))

    x_item = jnp.dtype(x.dtype).itemsize
    w_item = jnp.dtype(w_kn.dtype).itemsize
    o_item = x_item  # output cast back to x.dtype

    # Per-generation VMEM budget (v7x: 64 MiB physical -> ~38 MiB budget;
    # v5e/v6e: 128 MiB physical -> ~77 MiB budget, capped at 96 MiB).
    try:
        info = pltpu.get_tpu_info()
        vmem_phys = int(getattr(info, "vmem_capacity_bytes", 64 << 20))
    except Exception:  # interpret mode / older jax: assume the smallest (v7x)
        vmem_phys = 64 << 20
    budget = min(int(0.6 * vmem_phys), 96 << 20)

    # Sublane multiple for packed dtypes: f32 -> 8, bf16 -> 16, int8/fp8 -> 32.
    sub = max(8, 32 // x_item)

    # Solve tm from the budget instead of silently lowering the VMEM limit:
    #   2 * weight buffers (pipeline allocates 2 even for a resident operand)
    # + 2 * x tiles + 2 * out tiles, plus headroom.
    headroom = 2 << 20
    fixed = 2 * k * e_pad * w_item
    per_row = 2 * k * x_item + 2 * e_pad * o_item
    tm_fit = (budget - fixed - headroom) // per_row
    # TODO(synk): if fixed alone exceeds the budget (huge K * E), tile K with an
    # f32 accumulator / single-buffer the weight via memory_space=pl.ANY.
    tm = max(sub, min(int(tm_max), int(tm_fit)))
    if n < sub:
        tm = n                       # full-extent block: exempt from (sub,128)
    else:
        tm = min(tm, (max(n, sub) // sub) * sub if n < tm else tm)
        tm = max(sub, (tm // sub) * sub)

    grid = (pl.cdiv(n, tm),)

    vmem_needed = fixed + tm * per_row + headroom
    vmem_limit = int(min(max(vmem_needed, 4 << 20), int(0.9 * vmem_phys)))

    kernel = functools.partial(_gate_kernel, expert_num=expert_num)
    out_pad = pl.pallas_call(
        kernel,
        out_shape=jax.ShapeDtypeStruct((n, e_pad), x.dtype),
        grid=grid,
        in_specs=[
            pl.BlockSpec((tm, k), lambda i: (i, 0)),       # x: tiled over tokens
            pl.BlockSpec((k, e_pad), lambda i: (0, 0)),    # weight: resident
        ],
        out_specs=pl.BlockSpec((tm, e_pad), lambda i: (i, 0)),
        compiler_params=pltpu.CompilerParams(
            dimension_semantics=("parallel",),
            vmem_limit_bytes=vmem_limit,
        ),
    )(x, w_kn)

    if trim_output:
        # Downstream top-k can instead consume the padded (N, e_pad) output
        # directly (trim_output=False) and skip this extra HBM pass.
        return out_pad[:, :expert_num]
    return out_pad


def _reference(x, weight):
    logits = x @ weight.T
    logits = logits - jnp.max(logits, axis=1, keepdims=True)
    e = jnp.exp(logits)
    return e / jnp.sum(e, axis=1, keepdims=True)


if __name__ == "__main__":
    # Small shapes consistent with the module: num_tokens=8, input_size=32, expert_num=4.
    num_tokens = 8
    input_size = 32
    expert_num = 4

    key = jax.random.PRNGKey(0)
    kx, kw = jax.random.split(key)

    x = jax.random.normal(kx, (num_tokens, input_size), dtype=jnp.float32)
    # Deterministic nn.Linear-style init: U(-1/sqrt(in), 1/sqrt(in)).
    bound = 1.0 / (input_size ** 0.5)
    weight = jax.random.uniform(
        kw, (expert_num, input_size), dtype=jnp.float32, minval=-bound, maxval=bound
    )

    y = jax.block_until_ready(clmoe_gate_forward(x, weight))

    y_ref = _reference(x, weight)
    assert y.shape == (num_tokens, expert_num)
    assert jnp.allclose(y, y_ref, atol=1e-5, rtol=1e-5), "mismatch vs reference"
    assert jnp.allclose(jnp.sum(y, axis=1), 1.0, atol=1e-5), "rows must sum to 1"

    print("KERNEL_OK")
</pallas_src>

<mosaic_0001>
module attributes {stable_mosaic.version = 11 : i64} {
  func.func @_gate_kernel(%arg0: i32, %arg1: memref<8x32xf32, #tpu.memory_space<vmem>>, %arg2: memref<32x128xf32, #tpu.memory_space<vmem>>, %arg3: memref<8x128xf32, #tpu.memory_space<vmem>>) attributes {dimension_semantics = [#tpu.dimension_semantics<parallel>], iteration_bounds = array<i64: 1>, scalar_prefetch = 0 : i64, scratch_operands = 0 : i64, tpu.core_type = #tpu.core_type<tc>, window_params = [{transform_indices = @transform_0, window_bounds = array<i64: 8, 32>}, {pipeline_mode = #tpu.pipeline_mode<synchronous>, transform_indices = @transform_1, window_bounds = array<i64: 32, 128>}, {transform_indices = @transform_2, window_bounds = array<i64: 8, 128>}]} {
    %c0 = arith.constant 0 : index
    %c0_0 = arith.constant 0 : index
    %0 = vector.load %arg1[%c0, %c0_0] : memref<8x32xf32, #tpu.memory_space<vmem>>, vector<8x32xf32>
    %c0_1 = arith.constant 0 : index
    %c0_2 = arith.constant 0 : index
    %1 = vector.load %arg2[%c0_1, %c0_2] : memref<32x128xf32, #tpu.memory_space<vmem>>, vector<32x128xf32>
    %cst = arith.constant dense<0.000000e+00> : vector<8x128xf32>
    %2 = tpu.matmul %0, %1, %cst {dimension_numbers = #tpu.dot_dimension_numbers<[1], [0], [0], [1], [0, 0, 1, 1], [], []>} : vector<8x32xf32>, vector<32x128xf32>, vector<8x128xf32> -> vector<8x128xf32>
    %3 = tpu.iota {dimensions = array<i32: 1>} : vector<8x128xi32>
    %c4_i32 = arith.constant 4 : i32
    %4 = vector.broadcast %c4_i32 : i32 to vector<8x128xi32>
    %5 = arith.cmpi slt, %3, %4 : vector<8x128xi32>
    %cst_3 = arith.constant 0xFF800000 : f32
    %6 = vector.broadcast %cst_3 : f32 to vector<8x128xf32>
    %7 = arith.select %5, %2, %6 : vector<8x128xi1>, vector<8x128xf32>
    %cst_4 = arith.constant dense<0xFF800000> : vector<8xf32>
    %8 = vector.multi_reduction <maximumf>, %7, %cst_4 [1] : vector<8x128xf32> to vector<8xf32>
    %9 = vector.shape_cast %8 : vector<8xf32> to vector<8x1xf32>
    %10 = vector.broadcast %9 : vector<8x1xf32> to vector<8x128xf32>
    %11 = arith.subf %7, %10 : vector<8x128xf32>
    %12 = math.exp %11 : vector<8x128xf32>
    %cst_5 = arith.constant dense<0.000000e+00> : vector<8xf32>
    %13 = vector.multi_reduction <add>, %12, %cst_5 [1] : vector<8x128xf32> to vector<8xf32>
    %14 = vector.shape_cast %13 : vector<8xf32> to vector<8x1xf32>
    %15 = tpu.reciprocal %14 : vector<8x1xf32> -> vector<8x1xf32>
    %16 = vector.broadcast %15 : vector<8x1xf32> to vector<8x128xf32>
    %17 = arith.mulf %12, %16 : vector<8x128xf32>
    %c0_6 = arith.constant 0 : index
    %c0_7 = arith.constant 0 : index
    %18 = vector.load %arg3[%c0_6, %c0_7] : memref<8x128xf32, #tpu.memory_space<vmem>>, vector<8x128xf32>
    tpu.vector_store %arg3[%c0_6, %c0_7], %17 {strides = array<i32>} : memref<8x128xf32, #tpu.memory_space<vmem>>, vector<8x128xf32>,
    return
  }
  func.func @transform_0(%arg0: i32) -> (i32, i32) {
    %c0_i32 = arith.constant 0 : i32
    %c0_i32_0 = arith.constant 0 : i32
    return %arg0, %c0_i32 : i32, i32
  }
  func.func @transform_1(%arg0: i32) -> (i32, i32) {
    %c0_i32 = arith.constant 0 : i32
    %c0_i32_0 = arith.constant 0 : i32
    %c0_i32_1 = arith.constant 0 : i32
    return %c0_i32, %c0_i32_0 : i32, i32
  }
  func.func @transform_2(%arg0: i32) -> (i32, i32) {
    %c0_i32 = arith.constant 0 : i32
    %c0_i32_0 = arith.constant 0 : i32
    return %arg0, %c0_i32 : i32, i32
  }
}

</mosaic_0001>

<llo_original>
// kernel: tpu_custom_call.1
$region0: #{tpu_custom_call.1}
  #allocation0 [shape = 'u32[]', space=smem, size = 0x4, offset = 0x4, fixed_abs, tag = 'smem constant byte address 0x4 - core index']
  #allocation1 [shape = 'u32[72,128]{1,0:T(1,128)}', space=vmem, size = 0x9000, scoped, tag = 'internal scratch']
  %s0 = inlined_call_operand.hbm [shape: f32[8,32], index: 0, kind: input, shape index: {}]
  %s1 = inlined_call_operand.hbm [shape: f32[32,128], index: 1, kind: input, shape index: {}]
  %s2 = inlined_call_operand.hbm [shape: f32[8,128], index: 2, kind: output, shape index: {}]
  %s3 = sld [smem:[#allocation0]]
  $region26: #{tpu_custom_call.1} parent=0
    _
  %s5 = ssub.s32 1, %s3
  %s6 = scalar_select 0, %s5, %s3
  $region1: #{tpu_custom_call.1} parent=0
    #allocation2 [shape = 'u8[4096]{0}', space=vmem, size = 0x1000, scoped, tag = 'input window, operand 0, single buffered']
    #allocation3 [shape = 's32[1]{0}', space=sflag, size = 0x4, scoped, tag = 'scoped memory for tpu_custom_call.1']
    #allocation4 [shape = 's32[1]{0}', space=sflag, size = 0x4, scoped, tag = 'scoped memory for tpu_custom_call.1']
    #allocation5 [shape = 'u8[16384]{0}', space=vmem, size = 0x4000, scoped, tag = 'input window, operand 1, single buffered']
    #allocation6 [shape = 's32[1]{0}', space=sflag, size = 0x4, scoped, tag = 'scoped memory for tpu_custom_call.1']
    #allocation7 [shape = 'u8[4096]{0}', space=vmem, size = 0x1000, scoped, tag = 'output window, operand 0, single buffered']
    %7 = vsyncpa [#allocation3], 0
    %8 = vsyncpa [#allocation6], 0
    %9 = vsyncpa [#allocation4], 0
    // Predicated region
    $region2: #{tpu_custom_call.1} parent=1 // pred_check
      _
    $region3: #{tpu_custom_call.1} parent=1 // pred_check_branch
      %11 = sbr.rel (0) target = $region5
    $region4: #{tpu_custom_call.1} parent=1 // pred_region
      %13 = vsyncadd [#allocation3], 0
      %s15 = sshll.u32 %s0, 4
      %s16 = int_to_ptr.hbm [resolvable:$true] %s15
      %s17 = sshll.u32 [#allocation2], 4
      %s18 = int_to_ptr.vmem [resolvable:$true] %s17
      %20 = dma.hbm_to_vmem [thread:$0]  %s16, 128, %s18, [#allocation3]
    $region5: #{tpu_custom_call.1} parent=1 // pred_fallthru
      _
    // Predicated region
    $region6: #{tpu_custom_call.1} parent=1 // pred_check
      _
    $region7: #{tpu_custom_call.1} parent=1 // pred_check_branch
      %22 = sbr.rel (0) target = $region9
    $region8: #{tpu_custom_call.1} parent=1 // pred_region
      %24 = vsyncadd [#allocation6], 0
      %s25 = sshll.u32 %s1, 4
      %s26 = int_to_ptr.hbm [resolvable:$true] %s25
      %s27 = sshll.u32 [#allocation5], 4
      %s28 = int_to_ptr.vmem [resolvable:$true] %s27
      %33 = dma.hbm_to_vmem [thread:$0]  %s26, 512, %s28, [#allocation6], 128, 128, 8
    $region9: #{tpu_custom_call.1} parent=1 // pred_fallthru
      _
    // Predicated region
    $region10: #{tpu_custom_call.1} parent=1 // pred_check
      _
    $region11: #{tpu_custom_call.1} parent=1 // pred_check_branch
      %35 = sbr.rel (0) target = $region13
    $region12: #{tpu_custom_call.1} parent=1 // pred_region
      %37 = dma.done [#allocation3], 128
    $region13: #{tpu_custom_call.1} parent=1 // pred_fallthru
      _
    // Predicated region
    $region14: #{tpu_custom_call.1} parent=1 // pred_check
      _
    $region15: #{tpu_custom_call.1} parent=1 // pred_check_branch
      %39 = sbr.rel (0) target = $region17
    $region16: #{tpu_custom_call.1} parent=1 // pred_region
      %41 = dma.done [#allocation6], 512
    $region17: #{tpu_custom_call.1} parent=1 // pred_fallthru
      _
    %v42 = vld [vmem:[#allocation2] sm:$0xff]
    %v43 = vld [vmem:[#allocation5] sm:$0xff]
    %v44 = vld [vmem:[#allocation5 + $0x8] sm:$0xff]
    %v45 = vld [vmem:[#allocation5 + $0x10] sm:$0xff]
    %v46 = vld [vmem:[#allocation5 + $0x18] sm:$0xff]
    %vm47 = vcmask 261120
    %v49 = vsel %vm47, %v42, 0
    %51 = vmatpush.msra.mxu0 0.0
    %52 = vmatpush.msra.mxu0 0.0
    %53 = vmatpush.msra.mxu0 0.0
    %54 = vmatpush.msra.mxu0 0.0
    %55 = vmatpush.msra.mxu0 0.0
    %56 = vmatpush.msra.mxu0 0.0
    %57 = vmatpush.msra.mxu0 0.0
    %58 = vmatpush.msra.mxu0 0.0
    %59 = vmatpush.msra.mxu0 0.0
    %60 = vmatpush.msra.mxu0 0.0
    %61 = vmatpush.msra.mxu0 0.0
    %62 = vmatpush.msra.mxu0 0.0
    %63 = vmatpush.msra.mxu0 %v46
    %64 = vmatpush.msra.mxu0 %v45
    %65 = vmatpush.msra.mxu0 %v44
    %66 = vmatpush.msra.mxu0 %v43
    %67 = vmatmul.f32.gmra.mxu0 %v49
    %v68 = vpop.f32.mrf.mxu0
    %v69 = vadd.f32 0.0, %v68
    %70 = vdwg.mxu0
    %v71 = vlaneseq
    %v72 = vand.u32 %v71, 127
    %vm73 = vcmp.lt.s32.totalorder %v72, 4
    %v74 = vsel %vm73, %v69, -inf
    %75 = vmax.xlane.f32.xlu0 %v74
    %v76 = vpop.xlane.xlu0 %75
    %v77 = vsub.f32 %v74, %v76
    %v78 = vmul.f32 %v77, 1.442695
    %v79 = vpow.pop %v78
    %80 = vadd.xlane.f32.xlu0 %v79
    %v81 = vpop.xlane.xlu0 %80
    %v82 = vrcp.pop %v81
    %v83 = vmul.f32 %v81, %v82
    %v84 = vsub.f32 1.0, %v83
    %v85 = vmul.f32 %v82, %v84
    %v86 = vadd.f32 %v82, %v85
    %vm87 = vweird.f32 %v81
    %vm88 = vweird.f32 %v82
    %vm89 = vmor %vm87, %vm88
    %v90 = vsel %vm89, %v82, %v86
    %v91 = vand.u32 2147483647, %v81
    %vm92 = vcmp.eq.f32.partialorder %v91, 8.507059e+37
    %v93 = vand.u32 %v81, 2147483648
    %v94 = vor.u32 1.1754944e-38, %v93
    %v95 = vsel %vm92, %v94, %v90
    %v96 = vmul.f32 %v79, %v95
    %97 = vst [vmem:[#allocation7] sm:$0xff] %v96
    // Predicated region
    $region18: #{tpu_custom_call.1} parent=1 // pred_check
      _
    $region19: #{tpu_custom_call.1} parent=1 // pred_check_branch
      %99 = sbr.rel (0) target = $region21
    $region20: #{tpu_custom_call.1} parent=1 // pred_region
      %101 = vsyncadd [#allocation4], 0
      %s103 = sshll.u32 [#allocation7], 4
      %s104 = int_to_ptr.vmem [resolvable:$true] %s103
      %s105 = sshll.u32 %s2, 4
      %s106 = int_to_ptr.hbm [resolvable:$true] %s105
      %108 = dma.vmem_to_hbm [thread:$0]  %s104, 128, %s106, [#allocation4]
    $region21: #{tpu_custom_call.1} parent=1 // pred_fallthru
      _
    // Predicated region
    $region22: #{tpu_custom_call.1} parent=1 // pred_check
      _
    $region23: #{tpu_custom_call.1} parent=1 // pred_check_branch
      %110 = sbr.rel (0) target = $region25
    $region24: #{tpu_custom_call.1} parent=1 // pred_region
      %112 = dma.done [#allocation4], 128
    $region25: #{tpu_custom_call.1} parent=1 // pred_fallthru
      _
    %113 = vsyncpa [#allocation3], 1
    %114 = vsyncpa [#allocation6], 1
    %115 = vsyncpa [#allocation4], 1

</llo_original>
